<compile_context>
chip_gen: v5e
topology: v5e:2x2
jax: 0.10.0
libtpu: 0.0.40
codegen_flags: <defaults>
</compile_context>

<pallas_src>
import jax
import jax.numpy as jnp
from jax.experimental import pallas as pl
from jax.experimental.pallas import tpu as pltpu

NUM_EMBEDDINGS = 50  # nn.Embedding(50, num_pos_feats)


def _round_up(x, m):
    return (x + m - 1) // m * m


def _pick_feature_tile(F):
    """Feature tile for grid axis 1.

    Must be a multiple of 128 (so the (tF, 50) table block satisfies the
    sublane rule) or the full feature dim.
    """
    if F % 128 == 0:
        return 128
    return F


def _pos_embed_kernel(tab_ref, out_ref):
    """tab_ref: (tF, 50) slice of [col_emb.T ; row_emb.T]; out_ref: (tF, H, W)."""
    tF, H, W = out_ref.shape

    # Grid axis 0 selects which half of the channel dim this block belongs to.
    @pl.when(pl.program_id(0) == 0)
    def _():
        # pos[c, h, w] = col_emb[w, c]: broadcast the (tF, W) column table
        # over the H (sublane) axis.  W stays the lane axis of the output.
        col = tab_ref[:, pl.ds(0, W)]                                  # (tF, W)
        out_ref[...] = jnp.broadcast_to(col[:, None, :],
                                        (tF, H, W)).astype(out_ref.dtype)

    @pl.when(pl.program_id(0) == 1)
    def _():
        # pos[F + c, h, w] = row_emb[h, c]: broadcast the (tF, H) row table
        # over the W (lane) axis.
        row = tab_ref[:, pl.ds(0, H)]                                  # (tF, H)
        out_ref[...] = jnp.broadcast_to(row[:, :, None],
                                        (tF, H, W)).astype(out_ref.dtype)


def position_embedding_slab(h, w, col_weight, row_weight):
    """Un-batched (2F, H, W) position-embedding slab (the batch-invariant part)."""
    F = col_weight.shape[1]

    # Correctness guards (PyTorch would raise an index error past 50).
    assert 0 < h <= NUM_EMBEDDINGS and 0 < w <= NUM_EMBEDDINGS, (
        f"H={h}, W={w} must be in (0, {NUM_EMBEDDINGS}] (embedding table size)")
    assert col_weight.shape == (NUM_EMBEDDINGS, F), col_weight.shape
    assert row_weight.shape == (NUM_EMBEDDINGS, F), row_weight.shape
    assert col_weight.dtype == row_weight.dtype, "row/col table dtypes must match"

    tF = _pick_feature_tile(F)
    nF = F // tF
    dtype = col_weight.dtype
    itemsize = jnp.dtype(dtype).itemsize

    # One-time layout plumbing (~2*F*50 elements): stack the transposed tables
    # channel-major so the kernel's input block index equals its output
    # channel-block index:  tab[c, n] = col_w[n, c] (c < F) / row_w[n, c - F].
    tab = jnp.concatenate([col_weight.T, row_weight.T], axis=0)       # (2F, 50)

    # VMEM footprint of one grid step (lane/sublane padded): double-buffered
    # in/out blocks + the in-kernel broadcast temp, with 2x headroom + 4 MiB.
    out_block = tF * _round_up(h, 8) * _round_up(w, 128) * itemsize
    in_block = _round_up(tF, 8) * _round_up(NUM_EMBEDDINGS, 128) * itemsize
    vmem_limit = min(96 * 1024 * 1024,
                     2 * (2 * out_block + 2 * in_block + out_block) + (4 << 20))

    return pl.pallas_call(
        _pos_embed_kernel,
        out_shape=jax.ShapeDtypeStruct((2 * F, h, w), dtype),
        grid_spec=pltpu.PrefetchScalarGridSpec(
            num_scalar_prefetch=0,
            grid=(2, nF),
            in_specs=[pl.BlockSpec((tF, NUM_EMBEDDINGS),
                                   lambda half, f: (half * nF + f, 0))],
            out_specs=pl.BlockSpec((tF, h, w),
                                   lambda half, f: (half * nF + f, 0, 0)),
        ),
        compiler_params=pltpu.CompilerParams(
            dimension_semantics=("parallel", "parallel"),
            vmem_limit_bytes=int(vmem_limit),
        ),
    )(tab)


def position_embedding_learned(x, col_weight, row_weight):
    """Forward of PositionEmbeddingLearned.

    x:          (B, C, H, W)  (NCHW, values unused -- only shape)
    col_weight: (50, F) col_embedding.weight
    row_weight: (50, F) row_embedding.weight
    returns:    (B, 2F, H, W) in the tables' dtype
    """
    B, _, H, W = x.shape
    pos_chw = position_embedding_slab(H, W, col_weight, row_weight)   # (2F, H, W)
    # Batch-invariant: keep the batch repeat as a lazy broadcast so XLA can
    # fuse it into the consumer instead of materializing B copies in HBM.
    return jnp.broadcast_to(pos_chw[None], (B,) + pos_chw.shape)


def _reference(x, col_weight, row_weight):
    B, _, H, W = x.shape
    F = col_weight.shape[1]
    x_emb = jnp.broadcast_to(col_weight[:W][None, :, :], (H, W, F))
    y_emb = jnp.broadcast_to(row_weight[:H][:, None, :], (H, W, F))
    pos = jnp.concatenate([x_emb, y_emb], axis=-1)                    # (H, W, 2F)
    pos = jnp.transpose(pos, (2, 0, 1))[None]                         # (1, 2F, H, W)
    return jnp.broadcast_to(pos, (B,) + pos.shape[1:])


if __name__ == "__main__":
    key = jax.random.PRNGKey(0)
    k_x, k_row, k_col, k_x2, k_row2, k_col2 = jax.random.split(key, 6)

    # Case 1: small F (not 128-aligned -> single feature tile), 16x16 spatial.
    B, C, H, W = 2, 4, 16, 16
    F = 32
    row_w = jax.random.uniform(k_row, (NUM_EMBEDDINGS, F), dtype=jnp.float32)
    col_w = jax.random.uniform(k_col, (NUM_EMBEDDINGS, F), dtype=jnp.float32)
    x = jax.random.normal(k_x, (B, C, H, W), dtype=jnp.float32)

    pos = jax.block_until_ready(position_embedding_learned(x, col_w, row_w))
    assert pos.shape == (B, 2 * F, H, W), pos.shape
    assert jnp.allclose(pos, _reference(x, col_w, row_w)), "mismatch vs reference (case 1)"

    # Case 2: module-default F=256 (128-aligned feature tiles) + odd spatial dims.
    B2, C2, H2, W2 = 1, 3, 9, 11
    F2 = 256
    row_w2 = jax.random.uniform(k_row2, (NUM_EMBEDDINGS, F2), dtype=jnp.float32)
    col_w2 = jax.random.uniform(k_col2, (NUM_EMBEDDINGS, F2), dtype=jnp.float32)
    x2 = jax.random.normal(k_x2, (B2, C2, H2, W2), dtype=jnp.float32)

    pos2 = jax.block_until_ready(position_embedding_learned(x2, col_w2, row_w2))
    assert pos2.shape == (B2, 2 * F2, H2, W2), pos2.shape
    assert jnp.allclose(pos2, _reference(x2, col_w2, row_w2)), "mismatch vs reference (case 2)"

    print("KERNEL_OK")
</pallas_src>

<mosaic_0001>
module attributes {stable_mosaic.version = 11 : i64} {
  func.func @_pos_embed_kernel(%arg0: i32, %arg1: i32, %arg2: memref<32x50xf32, #tpu.memory_space<vmem>>, %arg3: memref<32x16x16xf32, #tpu.memory_space<vmem>>) attributes {dimension_semantics = [#tpu.dimension_semantics<parallel>, #tpu.dimension_semantics<parallel>], iteration_bounds = array<i64: 2, 1>, scalar_prefetch = 0 : i64, scratch_operands = 0 : i64, tpu.core_type = #tpu.core_type<tc>, window_params = [{transform_indices = @transform_0, window_bounds = array<i64: 32, 50>}, {transform_indices = @transform_1, window_bounds = array<i64: 32, 16, 16>}]} {
    %c0_i32 = arith.constant 0 : i32
    %0 = arith.cmpi eq, %arg0, %c0_i32 : i32
    %1 = arith.extui %0 : i1 to i32
    %c0_i32_0 = arith.constant 0 : i32
    %2 = arith.cmpi ne, %1, %c0_i32_0 : i32
    scf.if %2 {
      %c0 = arith.constant 0 : index
      %c0_2 = arith.constant 0 : index
      %6 = vector.load %arg2[%c0, %c0_2] : memref<32x50xf32, #tpu.memory_space<vmem>>, vector<32x16xf32>
      %7 = vector.shape_cast %6 : vector<32x16xf32> to vector<32x1x16xf32>
      %8 = vector.shape_cast %7 : vector<32x1x16xf32> to vector<32x1x16xf32>
      %9 = vector.broadcast %8 : vector<32x1x16xf32> to vector<32x16x16xf32>
      %c0_3 = arith.constant 0 : index
      %c0_4 = arith.constant 0 : index
      %c0_5 = arith.constant 0 : index
      %10 = vector.load %arg3[%c0_3, %c0_4, %c0_5] : memref<32x16x16xf32, #tpu.memory_space<vmem>>, vector<32x16x16xf32>
      tpu.vector_store %arg3[%c0_3, %c0_4, %c0_5], %9 {strides = array<i32>} : memref<32x16x16xf32, #tpu.memory_space<vmem>>, vector<32x16x16xf32>,
    } else {
    }
    %c1_i32 = arith.constant 1 : i32
    %3 = arith.cmpi eq, %arg0, %c1_i32 : i32
    %4 = arith.extui %3 : i1 to i32
    %c0_i32_1 = arith.constant 0 : i32
    %5 = arith.cmpi ne, %4, %c0_i32_1 : i32
    scf.if %5 {
      %c0 = arith.constant 0 : index
      %c0_2 = arith.constant 0 : index
      %6 = vector.load %arg2[%c0, %c0_2] : memref<32x50xf32, #tpu.memory_space<vmem>>, vector<32x16xf32>
      %7 = vector.shape_cast %6 : vector<32x16xf32> to vector<32x16x1xf32>
      %8 = vector.shape_cast %7 : vector<32x16x1xf32> to vector<32x16x1xf32>
      %9 = vector.broadcast %8 : vector<32x16x1xf32> to vector<32x16x16xf32>
      %c0_3 = arith.constant 0 : index
      %c0_4 = arith.constant 0 : index
      %c0_5 = arith.constant 0 : index
      %10 = vector.load %arg3[%c0_3, %c0_4, %c0_5] : memref<32x16x16xf32, #tpu.memory_space<vmem>>, vector<32x16x16xf32>
      tpu.vector_store %arg3[%c0_3, %c0_4, %c0_5], %9 {strides = array<i32>} : memref<32x16x16xf32, #tpu.memory_space<vmem>>, vector<32x16x16xf32>,
    } else {
    }
    return
  }
  func.func @transform_0(%arg0: i32, %arg1: i32) -> (i32, i32) {
    %c1_i32 = arith.constant 1 : i32
    %0 = arith.muli %arg0, %c1_i32 : i32
    %1 = arith.addi %0, %arg1 : i32
    %c0_i32 = arith.constant 0 : i32
    %c0_i32_0 = arith.constant 0 : i32
    return %1, %c0_i32 : i32, i32
  }
  func.func @transform_1(%arg0: i32, %arg1: i32) -> (i32, i32, i32) {
    %c1_i32 = arith.constant 1 : i32
    %0 = arith.muli %arg0, %c1_i32 : i32
    %1 = arith.addi %0, %arg1 : i32
    %c0_i32 = arith.constant 0 : i32
    %c0_i32_0 = arith.constant 0 : i32
    %c0_i32_1 = arith.constant 0 : i32
    return %1, %c0_i32, %c0_i32_0 : i32, i32, i32
  }
}

</mosaic_0001>

<llo_original>
// kernel: tpu_custom_call.1
$region0: #{tpu_custom_call.1}
  #allocation0 [shape = 'u32[]', space=smem, size = 0x4, offset = 0x4, fixed_abs, tag = 'smem constant byte address 0x4 - core index']
  #allocation1 [shape = 'u32[72,128]{1,0:T(1,128)}', space=vmem, size = 0x9000, scoped, tag = 'internal scratch']
  %s0 = inlined_call_operand.vmem [shape: f32[64,50], index: 0, kind: input, shape index: {}]
  %s1 = inlined_call_operand.vmem [shape: f32[64,16,16], index: 1, kind: output, shape index: {}]
  %s2 = sld [smem:[#allocation0]]
  $region45: #{tpu_custom_call.1} parent=0
    _
  %s4 = ssub.s32 1, %s2
  %s5 = scalar_select 0, %s4, %s2
  loop: start=0, step=1, limit=4
  $region2: #{tpu_custom_call.1} parent=0 // loop_pre_header
    _
  $region3: #{tpu_custom_call.1} parent=0 // loop_header
    %s7 = sphi 0, %s11
    %p8 = scmp.ge.s32.totalorder %s7, 4
    %s14 = sphi 0, %s26
    %s15 = sphi 0, %s22
    %s16 = sphi 0, %s14
    %s17 = sphi 0, %s15
    %s18 = sphi 0, %s16
    %s19 = sphi 0, %s17
    %s31 = sphi 0, %s33
    %s34 = sphi 0, %s31
    %s35 = sphi 0, %s34
    %s51 = sphi 0, %s35
    %s59 = sphi 0, %s61
    %s62 = sphi 0, %s59
    %s63 = sphi 0, %s62
    %s79 = sphi 0, %s63
  $region4: #{tpu_custom_call.1} parent=0 // loop_header_branch
    %10 = sbr.rel (%p8) target = $region8
  $region5: #{tpu_custom_call.1} parent=0 // loop_body
    %s12 = ssub.s32 %s7, 1
    %s13 = ssub.s32 %s7, 2
    %s20 = sadd.s32 1, %s15
    %p21 = scmp.ge.s32.totalorder %s20, 1
    %s22 = scalar_select %p21, 0, %s20
    %s23 = sadd.s32 1, %s14
    %s24 = scalar_select %p21, %s23, %s14
    %p25 = scmp.ge.s32.totalorder %s24, 2
    %s26 = scalar_select %p25, 0, %s24
    %s27 = sadd.s32 %s14, %s15
    %s28 = sadd.s32 %s26, %s22
    %s29 = ssub.s32 %s27, %s28
    %p30 = scmp.eq.s32.totalorder %s29, 0
    %s32 = sadd.s32 %s31, 1
    %s33 = scalar_select %p30, %s31, %s32
    %p36 = pneg %p30
    %p37 = scmp.eq.s32.totalorder %s7, 1
    %p38 = por %p36, %p37
    %p39 = scmp.ne.s32.totalorder %s31, %s34
    %p40 = scmp.eq.s32.totalorder %s7, 0
    %p41 = por %p39, %p40
    %p42 = scmp.ne.s32.totalorder %s31, %s34
    %p43 = scmp.eq.s32.totalorder %s12, 1
    %p44 = por %p42, %p43
    %p45 = scmp.ne.s32.totalorder %s34, %s35
    %p46 = scmp.eq.s32.totalorder %s12, 0
    %p47 = por %p45, %p46
    %p48 = scmp.ne.s32.totalorder %s34, %s35
    %p49 = scmp.eq.s32.totalorder %s13, 1
    %p50 = por %p48, %p49
    %p52 = scmp.ne.s32.totalorder %s35, %s51
    %p53 = scmp.eq.s32.totalorder %s13, 0
    %p54 = por %p52, %p53
    %s55 = sadd.s32 %s14, %s15
    %s56 = sadd.s32 %s26, %s22
    %s57 = ssub.s32 %s55, %s56
    %p58 = scmp.eq.s32.totalorder %s57, 0
    %s60 = sadd.s32 %s59, 1
    %s61 = scalar_select %p58, %s59, %s60
    %p64 = pneg %p58
    %p65 = scmp.eq.s32.totalorder %s7, 1
    %p66 = por %p64, %p65
    %p67 = scmp.ne.s32.totalorder %s59, %s62
    %p68 = scmp.eq.s32.totalorder %s7, 0
    %p69 = por %p67, %p68
    %p70 = scmp.ne.s32.totalorder %s59, %s62
    %p71 = scmp.eq.s32.totalorder %s12, 1
    %p72 = por %p70, %p71
    %p73 = scmp.ne.s32.totalorder %s62, %s63
    %p74 = scmp.eq.s32.totalorder %s12, 0
    %p75 = por %p73, %p74
    %p76 = scmp.ne.s32.totalorder %s62, %s63
    %p77 = scmp.eq.s32.totalorder %s13, 1
    %p78 = por %p76, %p77
    %p80 = scmp.ne.s32.totalorder %s63, %s79
    %p81 = scmp.eq.s32.totalorder %s13, 0
    %p82 = por %p80, %p81
    %p83 = scmp.le.s32.totalorder 1, %s7
    %p84 = scmp.lt.s32.totalorder %s7, 3
    %p85 = pnand %p83, %p84
    %p86 = pneg %p85
    // Predicated region
    $region9: #{tpu_custom_call.1} parent=5 // pred_check
      _
    $region10: #{tpu_custom_call.1} parent=5 // pred_check_branch
      %88 = sbr.rel (%p85) target = $region12
    $region11: #{tpu_custom_call.1} parent=5 // pred_region
      %s89 = ssub.s32 %s7, 1
    $region12: #{tpu_custom_call.1} parent=5 // pred_fallthru
      _
    %p90 = scmp.lt.s32.totalorder %s7, 2
    // Predicated region
    $region13: #{tpu_custom_call.1} parent=5 // pred_check
      %p91 = pneg %p90
    $region14: #{tpu_custom_call.1} parent=5 // pred_check_branch
      %93 = sbr.rel (%p91) target = $region16
    $region15: #{tpu_custom_call.1} parent=5 // pred_region
      // Predicated region
      $region17: #{tpu_custom_call.1} parent=15 // pred_check
        %p94 = pneg %p41
      $region18: #{tpu_custom_call.1} parent=15 // pred_check_branch
        %96 = sbr.rel (%p94) target = $region20
      $region19: #{tpu_custom_call.1} parent=15 // pred_region
        %s97 = sadd.s32 %s14, %s15
        %s98 = smul.u32 4, %s97
        %p99 = scmp.lt.s32.totalorder %s98, 7
        %s100 = scalar_select %p99, %s98, 7
        %s101 = smul.addr %s100, 8
        %s102 = scalar_lea.vmem %s0, %s101
        %s103 = sadd.s32 %s14, %s15
        %s104 = smul.u32 4, %s103
      $region20: #{tpu_custom_call.1} parent=15 // pred_fallthru
        _
    $region16: #{tpu_custom_call.1} parent=5 // pred_fallthru
      _
    %p105 = scmp.le.s32.totalorder 1, %s7
    %p106 = scmp.lt.s32.totalorder %s7, 3
    %p107 = pnand %p105, %p106
    %p108 = pneg %p107
    // Predicated region
    $region21: #{tpu_custom_call.1} parent=5 // pred_check
      _
    $region22: #{tpu_custom_call.1} parent=5 // pred_check_branch
      %110 = sbr.rel (%p107) target = $region24
    $region23: #{tpu_custom_call.1} parent=5 // pred_region
      %s111 = ssub.s32 %s7, 1
      %s112 = sadd.s32 %s16, %s17
      %s113 = smul.u32 4, %s112
      %p114 = scmp.lt.s32.totalorder %s113, 7
      %s115 = scalar_select %p114, %s113, 7
      %s116 = smul.addr %s115, 8
      %s117 = scalar_lea.vmem %s0, %s116
      %p118 = pneg %p47
      %p119 = pneg %p44
      %p120 = pneg %p75
      %p121 = pneg %p72
      %s122 = sadd.s32 %s16, %s17
      %s123 = smul.u32 32, %s122
      %p124 = scmp.lt.s32.totalorder %s123, 63
      %s125 = scalar_select %p124, %s123, 63
      %s126 = smul.addr %s125, 2
      %s127 = smul.addr %s126, 8
      %s128 = scalar_lea.vmem %s1, %s127
      %s129 = sadd.s32 %s16, %s17
      %s130 = smul.u32 4, %s129
      %p131 = scmp.lt.s32.totalorder %s130, 7
      %s132 = scalar_select %p131, %s130, 7
      %s133 = smul.addr %s132, 8
      %s134 = scalar_lea.vmem %s0, %s133
      %s135 = sadd.s32 %s16, %s17
      %s136 = smul.u32 4, %s135
      %s137 = sadd.s32 %s16, %s17
      %s138 = smul.u32 32, %s137
      %p139 = scmp.lt.s32.totalorder %s138, 63
      %s140 = scalar_select %p139, %s138, 63
      %s141 = smul.addr %s140, 2
      %s142 = smul.addr %s141, 8
      %s143 = scalar_lea.vmem %s1, %s142
      %s144 = sadd.s32 %s16, %s17
      %s145 = smul.u32 32, %s144
      %p146 = scmp.eq.s32.totalorder %s16, 0
      // Predicated region
      $region25: #{tpu_custom_call.1} parent=23 // pred_check
        %p147 = pneg %p146
      $region26: #{tpu_custom_call.1} parent=23 // pred_check_branch
        %149 = sbr.rel (%p147) target = $region28
      $region27: #{tpu_custom_call.1} parent=23 // pred_region
        %v150 = vld [vmem:[%s134] sm:$0xff]
        %v151 = vld [vmem:[%s134 + $0x8] sm:$0xff]
        %v152 = vld [vmem:[%s134 + $0x10] sm:$0xff]
        %v153 = vld [vmem:[%s134 + $0x18] sm:$0xff]
        %v158 = vrot.slane %v150, 1
        %v159 = vrot.slane %v150, 2
        %v160 = vrot.slane %v150, 3
        %v161 = vrot.slane %v150, 4
        %v162 = vrot.slane %v150, 5
        %v163 = vrot.slane %v150, 6
        %v164 = vrot.slane %v150, 7
        %v165 = vrot.slane %v151, 1
        %v166 = vrot.slane %v151, 2
        %v167 = vrot.slane %v151, 3
        %v168 = vrot.slane %v151, 4
        %v169 = vrot.slane %v151, 5
        %v170 = vrot.slane %v151, 6
        %v171 = vrot.slane %v151, 7
        %v172 = vrot.slane %v152, 1
        %v173 = vrot.slane %v152, 2
        %v174 = vrot.slane %v152, 3
        %v175 = vrot.slane %v152, 4
        %v176 = vrot.slane %v152, 5
        %v177 = vrot.slane %v152, 6
        %v178 = vrot.slane %v152, 7
        %v179 = vrot.slane %v153, 1
        %v180 = vrot.slane %v153, 2
        %v181 = vrot.slane %v153, 3
        %v182 = vrot.slane %v153, 4
        %v183 = vrot.slane %v153, 5
        %v184 = vrot.slane %v153, 6
        %v185 = vrot.slane %v153, 7
        %v186 = vperm.slane %v150, 0
        %v187 = vperm.slane %v158, 0
        %v188 = vperm.slane %v159, 0
        %v189 = vperm.slane %v160, 0
        %v190 = vperm.slane %v161, 0
        %v191 = vperm.slane %v162, 0
        %v192 = vperm.slane %v163, 0
        %v193 = vperm.slane %v164, 0
        %v194 = vperm.slane %v151, 0
        %v195 = vperm.slane %v165, 0
        %v196 = vperm.slane %v166, 0
        %v197 = vperm.slane %v167, 0
        %v198 = vperm.slane %v168, 0
        %v199 = vperm.slane %v169, 0
        %v200 = vperm.slane %v170, 0
        %v201 = vperm.slane %v171, 0
        %v202 = vperm.slane %v152, 0
        %v203 = vperm.slane %v172, 0
        %v204 = vperm.slane %v173, 0
        %v205 = vperm.slane %v174, 0
        %v206 = vperm.slane %v175, 0
        %v207 = vperm.slane %v176, 0
        %v208 = vperm.slane %v177, 0
        %v209 = vperm.slane %v178, 0
        %v210 = vperm.slane %v153, 0
        %v211 = vperm.slane %v179, 0
        %v212 = vperm.slane %v180, 0
        %v213 = vperm.slane %v181, 0
        %v214 = vperm.slane %v182, 0
        %v215 = vperm.slane %v183, 0
        %v216 = vperm.slane %v184, 0
        %v217 = vperm.slane %v185, 0
        %vm250 = vcmask 130048
        %251 = vst.msk [vmem:[%s143] sm:$0xff] %vm250, %v186
        %252 = vst.msk [vmem:[%s143 + $0x8] sm:$0xff] %vm250, %v186
        %253 = vst.msk [vmem:[%s143 + $0x10] sm:$0xff] %vm250, %v187
        %254 = vst.msk [vmem:[%s143 + $0x18] sm:$0xff] %vm250, %v187
        %255 = vst.msk [vmem:[%s143 + $0x20] sm:$0xff] %vm250, %v188
        %256 = vst.msk [vmem:[%s143 + $0x28] sm:$0xff] %vm250, %v188
        %257 = vst.msk [vmem:[%s143 + $0x30] sm:$0xff] %vm250, %v189
        %258 = vst.msk [vmem:[%s143 + $0x38] sm:$0xff] %vm250, %v189
        %259 = vst.msk [vmem:[%s143 + $0x40] sm:$0xff] %vm250, %v190
        %260 = vst.msk [vmem:[%s143 + $0x48] sm:$0xff] %vm250, %v190
        %261 = vst.msk [vmem:[%s143 + $0x50] sm:$0xff] %vm250, %v191
        %262 = vst.msk [vmem:[%s143 + $0x58] sm:$0xff] %vm250, %v191
        %263 = vst.msk [vmem:[%s143 + $0x60] sm:$0xff] %vm250, %v192
        %264 = vst.msk [vmem:[%s143 + $0x68] sm:$0xff] %vm250, %v192
        %265 = vst.msk [vmem:[%s143 + $0x70] sm:$0xff] %vm250, %v193
        %266 = vst.msk [vmem:[%s143 + $0x78] sm:$0xff] %vm250, %v193
        %267 = vst.msk [vmem:[%s143 + $0x80] sm:$0xff] %vm250, %v194
        %268 = vst.msk [vmem:[%s143 + $0x88] sm:$0xff] %vm250, %v194
        %269 = vst.msk [vmem:[%s143 + $0x90] sm:$0xff] %vm250, %v195
        %270 = vst.msk [vmem:[%s143 + $0x98] sm:$0xff] %vm250, %v195
        %271 = vst.msk [vmem:[%s143 + $0xa0] sm:$0xff] %vm250, %v196
        %272 = vst.msk [vmem:[%s143 + $0xa8] sm:$0xff] %vm250, %v196
        %273 = vst.msk [vmem:[%s143 + $0xb0] sm:$0xff] %vm250, %v197
        %274 = vst.msk [vmem:[%s143 + $0xb8] sm:$0xff] %vm250, %v197
        %275 = vst.msk [vmem:[%s143 + $0xc0] sm:$0xff] %vm250, %v198
        %276 = vst.msk [vmem:[%s143 + $0xc8] sm:$0xff] %vm250, %v198
        %277 = vst.msk [vmem:[%s143 + $0xd0] sm:$0xff] %vm250, %v199
        %278 = vst.msk [vmem:[%s143 + $0xd8] sm:$0xff] %vm250, %v199
        %279 = vst.msk [vmem:[%s143 + $0xe0] sm:$0xff] %vm250, %v200
        %280 = vst.msk [vmem:[%s143 + $0xe8] sm:$0xff] %vm250, %v200
        %281 = vst.msk [vmem:[%s143 + $0xf0] sm:$0xff] %vm250, %v201
        %282 = vst.msk [vmem:[%s143 + $0xf8] sm:$0xff] %vm250, %v201
        %283 = vst.msk [vmem:[%s143 + $0x100] sm:$0xff] %vm250, %v202
        %284 = vst.msk [vmem:[%s143 + $0x108] sm:$0xff] %vm250, %v202
        %285 = vst.msk [vmem:[%s143 + $0x110] sm:$0xff] %vm250, %v203
        %286 = vst.msk [vmem:[%s143 + $0x118] sm:$0xff] %vm250, %v203
        %287 = vst.msk [vmem:[%s143 + $0x120] sm:$0xff] %vm250, %v204
        %288 = vst.msk [vmem:[%s143 + $0x128] sm:$0xff] %vm250, %v204
        %289 = vst.msk [vmem:[%s143 + $0x130] sm:$0xff] %vm250, %v205
        %290 = vst.msk [vmem:[%s143 + $0x138] sm:$0xff] %vm250, %v205
        %291 = vst.msk [vmem:[%s143 + $0x140] sm:$0xff] %vm250, %v206
        %292 = vst.msk [vmem:[%s143 + $0x148] sm:$0xff] %vm250, %v206
        %293 = vst.msk [vmem:[%s143 + $0x150] sm:$0xff] %vm250, %v207
        %294 = vst.msk [vmem:[%s143 + $0x158] sm:$0xff] %vm250, %v207
        %295 = vst.msk [vmem:[%s143 + $0x160] sm:$0xff] %vm250, %v208
        %296 = vst.msk [vmem:[%s143 + $0x168] sm:$0xff] %vm250, %v208
        %297 = vst.msk [vmem:[%s143 + $0x170] sm:$0xff] %vm250, %v209
        %298 = vst.msk [vmem:[%s143 + $0x178] sm:$0xff] %vm250, %v209
        %299 = vst.msk [vmem:[%s143 + $0x180] sm:$0xff] %vm250, %v210
        %300 = vst.msk [vmem:[%s143 + $0x188] sm:$0xff] %vm250, %v210
        %301 = vst.msk [vmem:[%s143 + $0x190] sm:$0xff] %vm250, %v211
        %302 = vst.msk [vmem:[%s143 + $0x198] sm:$0xff] %vm250, %v211
        %303 = vst.msk [vmem:[%s143 + $0x1a0] sm:$0xff] %vm250, %v212
        %304 = vst.msk [vmem:[%s143 + $0x1a8] sm:$0xff] %vm250, %v212
        %305 = vst.msk [vmem:[%s143 + $0x1b0] sm:$0xff] %vm250, %v213
        %306 = vst.msk [vmem:[%s143 + $0x1b8] sm:$0xff] %vm250, %v213
        %307 = vst.msk [vmem:[%s143 + $0x1c0] sm:$0xff] %vm250, %v214
        %308 = vst.msk [vmem:[%s143 + $0x1c8] sm:$0xff] %vm250, %v214
        %309 = vst.msk [vmem:[%s143 + $0x1d0] sm:$0xff] %vm250, %v215
        %310 = vst.msk [vmem:[%s143 + $0x1d8] sm:$0xff] %vm250, %v215
        %311 = vst.msk [vmem:[%s143 + $0x1e0] sm:$0xff] %vm250, %v216
        %312 = vst.msk [vmem:[%s143 + $0x1e8] sm:$0xff] %vm250, %v216
        %313 = vst.msk [vmem:[%s143 + $0x1f0] sm:$0xff] %vm250, %v217
        %314 = vst.msk [vmem:[%s143 + $0x1f8] sm:$0xff] %vm250, %v217
      $region28: #{tpu_custom_call.1} parent=23 // pred_fallthru
        _
      %p315 = scmp.eq.s32.totalorder %s16, 1
      // Predicated region
      $region29: #{tpu_custom_call.1} parent=23 // pred_check
        %p316 = pneg %p315
      $region30: #{tpu_custom_call.1} parent=23 // pred_check_branch
        %318 = sbr.rel (%p316) target = $region32
      $region31: #{tpu_custom_call.1} parent=23 // pred_region
        %v319 = vld [vmem:[%s134] sm:$0xff]
        %v320 = vld [vmem:[%s134 + $0x8] sm:$0xff]
        %v321 = vld [vmem:[%s134 + $0x10] sm:$0xff]
        %v322 = vld [vmem:[%s134 + $0x18] sm:$0xff]
        %v323 = vperm.slane %v319, 0
        %v324 = vlaneseq
        %v325 = vshrl.u32 %v324, 7
        %327 = vset.pattern.permute.xlu0 %v325
        %328 = vperm.xlu0 %327, %v323
        %v329 = vpop.permute.xlu0 %328
        %v330 = vlaneseq
        %v331 = vshrl.u32 %v330, 7
        %v332 = vadd.s32 %v331, 8
        %333 = vset.pattern.permute.xlu0 %v332
        %334 = vperm.xlu0 %333, %v323
        %v335 = vpop.permute.xlu0 %334
        %v336 = vperm.slane %v319, 1
        %v337 = vlaneseq
        %v338 = vshrl.u32 %v337, 7
        %340 = vset.pattern.permute.xlu0 %v338
        %341 = vperm.xlu0 %340, %v336
        %v342 = vpop.permute.xlu0 %341
        %v343 = vlaneseq
        %v344 = vshrl.u32 %v343, 7
        %v345 = vadd.s32 %v344, 8
        %346 = vset.pattern.permute.xlu0 %v345
        %347 = vperm.xlu0 %346, %v336
        %v348 = vpop.permute.xlu0 %347
        %v349 = vperm.slane %v319, 2
        %v350 = vlaneseq
        %v351 = vshrl.u32 %v350, 7
        %353 = vset.pattern.permute.xlu0 %v351
        %354 = vperm.xlu0 %353, %v349
        %v355 = vpop.permute.xlu0 %354
        %v356 = vlaneseq
        %v357 = vshrl.u32 %v356, 7
        %v358 = vadd.s32 %v357, 8
        %359 = vset.pattern.permute.xlu0 %v358
        %360 = vperm.xlu0 %359, %v349
        %v361 = vpop.permute.xlu0 %360
        %v362 = vperm.slane %v319, 3
        %v363 = vlaneseq
        %v364 = vshrl.u32 %v363, 7
        %366 = vset.pattern.permute.xlu0 %v364
        %367 = vperm.xlu0 %366, %v362
        %v368 = vpop.permute.xlu0 %367
        %v369 = vlaneseq
        %v370 = vshrl.u32 %v369, 7
        %v371 = vadd.s32 %v370, 8
        %372 = vset.pattern.permute.xlu0 %v371
        %373 = vperm.xlu0 %372, %v362
        %v374 = vpop.permute.xlu0 %373
        %v375 = vperm.slane %v319, 4
        %v376 = vlaneseq
        %v377 = vshrl.u32 %v376, 7
        %379 = vset.pattern.permute.xlu0 %v377
        %380 = vperm.xlu0 %379, %v375
        %v381 = vpop.permute.xlu0 %380
        %v382 = vlaneseq
        %v383 = vshrl.u32 %v382, 7
        %v384 = vadd.s32 %v383, 8
        %385 = vset.pattern.permute.xlu0 %v384
        %386 = vperm.xlu0 %385, %v375
        %v387 = vpop.permute.xlu0 %386
        %v388 = vperm.slane %v319, 5
        %v389 = vlaneseq
        %v390 = vshrl.u32 %v389, 7
        %392 = vset.pattern.permute.xlu0 %v390
        %393 = vperm.xlu0 %392, %v388
        %v394 = vpop.permute.xlu0 %393
        %v395 = vlaneseq
        %v396 = vshrl.u32 %v395, 7
        %v397 = vadd.s32 %v396, 8
        %398 = vset.pattern.permute.xlu0 %v397
        %399 = vperm.xlu0 %398, %v388
        %v400 = vpop.permute.xlu0 %399
        %v401 = vperm.slane %v319, 6
        %v402 = vlaneseq
        %v403 = vshrl.u32 %v402, 7
        %405 = vset.pattern.permute.xlu0 %v403
        %406 = vperm.xlu0 %405, %v401
        %v407 = vpop.permute.xlu0 %406
        %v408 = vlaneseq
        %v409 = vshrl.u32 %v408, 7
        %v410 = vadd.s32 %v409, 8
        %411 = vset.pattern.permute.xlu0 %v410
        %412 = vperm.xlu0 %411, %v401
        %v413 = vpop.permute.xlu0 %412
        %v414 = vperm.slane %v319, 7
        %v415 = vlaneseq
        %v416 = vshrl.u32 %v415, 7
        %418 = vset.pattern.permute.xlu0 %v416
        %419 = vperm.xlu0 %418, %v414
        %v420 = vpop.permute.xlu0 %419
        %v421 = vlaneseq
        %v422 = vshrl.u32 %v421, 7
        %v423 = vadd.s32 %v422, 8
        %424 = vset.pattern.permute.xlu0 %v423
        %425 = vperm.xlu0 %424, %v414
        %v426 = vpop.permute.xlu0 %425
        %v427 = vperm.slane %v320, 0
        %v428 = vlaneseq
        %v429 = vshrl.u32 %v428, 7
        %431 = vset.pattern.permute.xlu0 %v429
        %432 = vperm.xlu0 %431, %v427
        %v433 = vpop.permute.xlu0 %432
        %v434 = vlaneseq
        %v435 = vshrl.u32 %v434, 7
        %v436 = vadd.s32 %v435, 8
        %437 = vset.pattern.permute.xlu0 %v436
        %438 = vperm.xlu0 %437, %v427
        %v439 = vpop.permute.xlu0 %438
        %v440 = vperm.slane %v320, 1
        %v441 = vlaneseq
        %v442 = vshrl.u32 %v441, 7
        %444 = vset.pattern.permute.xlu0 %v442
        %445 = vperm.xlu0 %444, %v440
        %v446 = vpop.permute.xlu0 %445
        %v447 = vlaneseq
        %v448 = vshrl.u32 %v447, 7
        %v449 = vadd.s32 %v448, 8
        %450 = vset.pattern.permute.xlu0 %v449
        %451 = vperm.xlu0 %450, %v440
        %v452 = vpop.permute.xlu0 %451
        %v453 = vperm.slane %v320, 2
        %v454 = vlaneseq
        %v455 = vshrl.u32 %v454, 7
        %457 = vset.pattern.permute.xlu0 %v455
        %458 = vperm.xlu0 %457, %v453
        %v459 = vpop.permute.xlu0 %458
        %v460 = vlaneseq
        %v461 = vshrl.u32 %v460, 7
        %v462 = vadd.s32 %v461, 8
        %463 = vset.pattern.permute.xlu0 %v462
        %464 = vperm.xlu0 %463, %v453
        %v465 = vpop.permute.xlu0 %464
        %v466 = vperm.slane %v320, 3
        %v467 = vlaneseq
        %v468 = vshrl.u32 %v467, 7
        %470 = vset.pattern.permute.xlu0 %v468
        %471 = vperm.xlu0 %470, %v466
        %v472 = vpop.permute.xlu0 %471
        %v473 = vlaneseq
        %v474 = vshrl.u32 %v473, 7
        %v475 = vadd.s32 %v474, 8
        %476 = vset.pattern.permute.xlu0 %v475
        %477 = vperm.xlu0 %476, %v466
        %v478 = vpop.permute.xlu0 %477
        %v479 = vperm.slane %v320, 4
        %v480 = vlaneseq
        %v481 = vshrl.u32 %v480, 7
        %483 = vset.pattern.permute.xlu0 %v481
        %484 = vperm.xlu0 %483, %v479
        %v485 = vpop.permute.xlu0 %484
        %v486 = vlaneseq
        %v487 = vshrl.u32 %v486, 7
        %v488 = vadd.s32 %v487, 8
        %489 = vset.pattern.permute.xlu0 %v488
        %490 = vperm.xlu0 %489, %v479
        %v491 = vpop.permute.xlu0 %490
        %v492 = vperm.slane %v320, 5
        %v493 = vlaneseq
        %v494 = vshrl.u32 %v493, 7
        %496 = vset.pattern.permute.xlu0 %v494
        %497 = vperm.xlu0 %496, %v492
        %v498 = vpop.permute.xlu0 %497
        %v499 = vlaneseq
        %v500 = vshrl.u32 %v499, 7
        %v501 = vadd.s32 %v500, 8
        %502 = vset.pattern.permute.xlu0 %v501
        %503 = vperm.xlu0 %502, %v492
        %v504 = vpop.permute.xlu0 %503
        %v505 = vperm.slane %v320, 6
        %v506 = vlaneseq
        %v507 = vshrl.u32 %v506, 7
        %509 = vset.pattern.permute.xlu0 %v507
        %510 = vperm.xlu0 %509, %v505
        %v511 = vpop.permute.xlu0 %510
        %v512 = vlaneseq
        %v513 = vshrl.u32 %v512, 7
        %v514 = vadd.s32 %v513, 8
        %515 = vset.pattern.permute.xlu0 %v514
        %516 = vperm.xlu0 %515, %v505
        %v517 = vpop.permute.xlu0 %516
        %v518 = vperm.slane %v320, 7
        %v519 = vlaneseq
        %v520 = vshrl.u32 %v519, 7
        %522 = vset.pattern.permute.xlu0 %v520
        %523 = vperm.xlu0 %522, %v518
        %v524 = vpop.permute.xlu0 %523
        %v525 = vlaneseq
        %v526 = vshrl.u32 %v525, 7
        %v527 = vadd.s32 %v526, 8
        %528 = vset.pattern.permute.xlu0 %v527
        %529 = vperm.xlu0 %528, %v518
        %v530 = vpop.permute.xlu0 %529
        %v531 = vperm.slane %v321, 0
        %v532 = vlaneseq
        %v533 = vshrl.u32 %v532, 7
        %535 = vset.pattern.permute.xlu0 %v533
        %536 = vperm.xlu0 %535, %v531
        %v537 = vpop.permute.xlu0 %536
        %v538 = vlaneseq
        %v539 = vshrl.u32 %v538, 7
        %v540 = vadd.s32 %v539, 8
        %541 = vset.pattern.permute.xlu0 %v540
        %542 = vperm.xlu0 %541, %v531
        %v543 = vpop.permute.xlu0 %542
        %v544 = vperm.slane %v321, 1
        %v545 = vlaneseq
        %v546 = vshrl.u32 %v545, 7
        %548 = vset.pattern.permute.xlu0 %v546
        %549 = vperm.xlu0 %548, %v544
        %v550 = vpop.permute.xlu0 %549
        %v551 = vlaneseq
        %v552 = vshrl.u32 %v551, 7
        %v553 = vadd.s32 %v552, 8
        %554 = vset.pattern.permute.xlu0 %v553
        %555 = vperm.xlu0 %554, %v544
        %v556 = vpop.permute.xlu0 %555
        %v557 = vperm.slane %v321, 2
        %v558 = vlaneseq
        %v559 = vshrl.u32 %v558, 7
        %561 = vset.pattern.permute.xlu0 %v559
        %562 = vperm.xlu0 %561, %v557
        %v563 = vpop.permute.xlu0 %562
        %v564 = vlaneseq
        %v565 = vshrl.u32 %v564, 7
        %v566 = vadd.s32 %v565, 8
        %567 = vset.pattern.permute.xlu0 %v566
        %568 = vperm.xlu0 %567, %v557
        %v569 = vpop.permute.xlu0 %568
        %v570 = vperm.slane %v321, 3
        %v571 = vlaneseq
        %v572 = vshrl.u32 %v571, 7
        %574 = vset.pattern.permute.xlu0 %v572
        %575 = vperm.xlu0 %574, %v570
        %v576 = vpop.permute.xlu0 %575
        %v577 = vlaneseq
        %v578 = vshrl.u32 %v577, 7
        %v579 = vadd.s32 %v578, 8
        %580 = vset.pattern.permute.xlu0 %v579
        %581 = vperm.xlu0 %580, %v570
        %v582 = vpop.permute.xlu0 %581
        %v583 = vperm.slane %v321, 4
        %v584 = vlaneseq
        %v585 = vshrl.u32 %v584, 7
        %587 = vset.pattern.permute.xlu0 %v585
        %588 = vperm.xlu0 %587, %v583
        %v589 = vpop.permute.xlu0 %588
        %v590 = vlaneseq
        %v591 = vshrl.u32 %v590, 7
        %v592 = vadd.s32 %v591, 8
        %593 = vset.pattern.permute.xlu0 %v592
        %594 = vperm.xlu0 %593, %v583
        %v595 = vpop.permute.xlu0 %594
        %v596 = vperm.slane %v321, 5
        %v597 = vlaneseq
        %v598 = vshrl.u32 %v597, 7
        %600 = vset.pattern.permute.xlu0 %v598
        %601 = vperm.xlu0 %600, %v596
        %v602 = vpop.permute.xlu0 %601
        %v603 = vlaneseq
        %v604 = vshrl.u32 %v603, 7
        %v605 = vadd.s32 %v604, 8
        %606 = vset.pattern.permute.xlu0 %v605
        %607 = vperm.xlu0 %606, %v596
        %v608 = vpop.permute.xlu0 %607
        %v609 = vperm.slane %v321, 6
        %v610 = vlaneseq
        %v611 = vshrl.u32 %v610, 7
        %613 = vset.pattern.permute.xlu0 %v611
        %614 = vperm.xlu0 %613, %v609
        %v615 = vpop.permute.xlu0 %614
        %v616 = vlaneseq
        %v617 = vshrl.u32 %v616, 7
        %v618 = vadd.s32 %v617, 8
        %619 = vset.pattern.permute.xlu0 %v618
        %620 = vperm.xlu0 %619, %v609
        %v621 = vpop.permute.xlu0 %620
        %v622 = vperm.slane %v321, 7
        %v623 = vlaneseq
        %v624 = vshrl.u32 %v623, 7
        %626 = vset.pattern.permute.xlu0 %v624
        %627 = vperm.xlu0 %626, %v622
        %v628 = vpop.permute.xlu0 %627
        %v629 = vlaneseq
        %v630 = vshrl.u32 %v629, 7
        %v631 = vadd.s32 %v630, 8
        %632 = vset.pattern.permute.xlu0 %v631
        %633 = vperm.xlu0 %632, %v622
        %v634 = vpop.permute.xlu0 %633
        %v635 = vperm.slane %v322, 0
        %v636 = vlaneseq
        %v637 = vshrl.u32 %v636, 7
        %639 = vset.pattern.permute.xlu0 %v637
        %640 = vperm.xlu0 %639, %v635
        %v641 = vpop.permute.xlu0 %640
        %v642 = vlaneseq
        %v643 = vshrl.u32 %v642, 7
        %v644 = vadd.s32 %v643, 8
        %645 = vset.pattern.permute.xlu0 %v644
        %646 = vperm.xlu0 %645, %v635
        %v647 = vpop.permute.xlu0 %646
        %v648 = vperm.slane %v322, 1
        %v649 = vlaneseq
        %v650 = vshrl.u32 %v649, 7
        %652 = vset.pattern.permute.xlu0 %v650
        %653 = vperm.xlu0 %652, %v648
        %v654 = vpop.permute.xlu0 %653
        %v655 = vlaneseq
        %v656 = vshrl.u32 %v655, 7
        %v657 = vadd.s32 %v656, 8
        %658 = vset.pattern.permute.xlu0 %v657
        %659 = vperm.xlu0 %658, %v648
        %v660 = vpop.permute.xlu0 %659
        %v661 = vperm.slane %v322, 2
        %v662 = vlaneseq
        %v663 = vshrl.u32 %v662, 7
        %665 = vset.pattern.permute.xlu0 %v663
        %666 = vperm.xlu0 %665, %v661
        %v667 = vpop.permute.xlu0 %666
        %v668 = vlaneseq
        %v669 = vshrl.u32 %v668, 7
        %v670 = vadd.s32 %v669, 8
        %671 = vset.pattern.permute.xlu0 %v670
        %672 = vperm.xlu0 %671, %v661
        %v673 = vpop.permute.xlu0 %672
        %v674 = vperm.slane %v322, 3
        %v675 = vlaneseq
        %v676 = vshrl.u32 %v675, 7
        %678 = vset.pattern.permute.xlu0 %v676
        %679 = vperm.xlu0 %678, %v674
        %v680 = vpop.permute.xlu0 %679
        %v681 = vlaneseq
        %v682 = vshrl.u32 %v681, 7
        %v683 = vadd.s32 %v682, 8
        %684 = vset.pattern.permute.xlu0 %v683
        %685 = vperm.xlu0 %684, %v674
        %v686 = vpop.permute.xlu0 %685
        %v687 = vperm.slane %v322, 4
        %v688 = vlaneseq
        %v689 = vshrl.u32 %v688, 7
        %691 = vset.pattern.permute.xlu0 %v689
        %692 = vperm.xlu0 %691, %v687
        %v693 = vpop.permute.xlu0 %692
        %v694 = vlaneseq
        %v695 = vshrl.u32 %v694, 7
        %v696 = vadd.s32 %v695, 8
        %697 = vset.pattern.permute.xlu0 %v696
        %698 = vperm.xlu0 %697, %v687
        %v699 = vpop.permute.xlu0 %698
        %v700 = vperm.slane %v322, 5
        %v701 = vlaneseq
        %v702 = vshrl.u32 %v701, 7
        %704 = vset.pattern.permute.xlu0 %v702
        %705 = vperm.xlu0 %704, %v700
        %v706 = vpop.permute.xlu0 %705
        %v707 = vlaneseq
        %v708 = vshrl.u32 %v707, 7
        %v709 = vadd.s32 %v708, 8
        %710 = vset.pattern.permute.xlu0 %v709
        %711 = vperm.xlu0 %710, %v700
        %v712 = vpop.permute.xlu0 %711
        %v713 = vperm.slane %v322, 6
        %v714 = vlaneseq
        %v715 = vshrl.u32 %v714, 7
        %717 = vset.pattern.permute.xlu0 %v715
        %718 = vperm.xlu0 %717, %v713
        %v719 = vpop.permute.xlu0 %718
        %v720 = vlaneseq
        %v721 = vshrl.u32 %v720, 7
        %v722 = vadd.s32 %v721, 8
        %723 = vset.pattern.permute.xlu0 %v722
        %724 = vperm.xlu0 %723, %v713
        %v725 = vpop.permute.xlu0 %724
        %v726 = vperm.slane %v322, 7
        %v727 = vlaneseq
        %v728 = vshrl.u32 %v727, 7
        %730 = vset.pattern.permute.xlu0 %v728
        %731 = vperm.xlu0 %730, %v726
        %v732 = vpop.permute.xlu0 %731
        %v733 = vlaneseq
        %v734 = vshrl.u32 %v733, 7
        %v735 = vadd.s32 %v734, 8
        %736 = vset.pattern.permute.xlu0 %v735
        %737 = vperm.xlu0 %736, %v726
        %v738 = vpop.permute.xlu0 %737
        %vm739 = vcmask 130048
        %740 = vst.msk [vmem:[%s143] sm:$0xff] %vm739, %v329
        %741 = vst.msk [vmem:[%s143 + $0x8] sm:$0xff] %vm739, %v335
        %742 = vst.msk [vmem:[%s143 + $0x10] sm:$0xff] %vm739, %v342
        %743 = vst.msk [vmem:[%s143 + $0x18] sm:$0xff] %vm739, %v348
        %744 = vst.msk [vmem:[%s143 + $0x20] sm:$0xff] %vm739, %v355
        %745 = vst.msk [vmem:[%s143 + $0x28] sm:$0xff] %vm739, %v361
        %746 = vst.msk [vmem:[%s143 + $0x30] sm:$0xff] %vm739, %v368
        %747 = vst.msk [vmem:[%s143 + $0x38] sm:$0xff] %vm739, %v374
        %748 = vst.msk [vmem:[%s143 + $0x40] sm:$0xff] %vm739, %v381
        %749 = vst.msk [vmem:[%s143 + $0x48] sm:$0xff] %vm739, %v387
        %750 = vst.msk [vmem:[%s143 + $0x50] sm:$0xff] %vm739, %v394
        %751 = vst.msk [vmem:[%s143 + $0x58] sm:$0xff] %vm739, %v400
        %752 = vst.msk [vmem:[%s143 + $0x60] sm:$0xff] %vm739, %v407
        %753 = vst.msk [vmem:[%s143 + $0x68] sm:$0xff] %vm739, %v413
        %754 = vst.msk [vmem:[%s143 + $0x70] sm:$0xff] %vm739, %v420
        %755 = vst.msk [vmem:[%s143 + $0x78] sm:$0xff] %vm739, %v426
        %756 = vst.msk [vmem:[%s143 + $0x80] sm:$0xff] %vm739, %v433
        %757 = vst.msk [vmem:[%s143 + $0x88] sm:$0xff] %vm739, %v439
        %758 = vst.msk [vmem:[%s143 + $0x90] sm:$0xff] %vm739, %v446
        %759 = vst.msk [vmem:[%s143 + $0x98] sm:$0xff] %vm739, %v452
        %760 = vst.msk [vmem:[%s143 + $0xa0] sm:$0xff] %vm739, %v459
        %761 = vst.msk [vmem:[%s143 + $0xa8] sm:$0xff] %vm739, %v465
        %762 = vst.msk [vmem:[%s143 + $0xb0] sm:$0xff] %vm739, %v472
        %763 = vst.msk [vmem:[%s143 + $0xb8] sm:$0xff] %vm739, %v478
        %764 = vst.msk [vmem:[%s143 + $0xc0] sm:$0xff] %vm739, %v485
        %765 = vst.msk [vmem:[%s143 + $0xc8] sm:$0xff] %vm739, %v491
        %766 = vst.msk [vmem:[%s143 + $0xd0] sm:$0xff] %vm739, %v498
        %767 = vst.msk [vmem:[%s143 + $0xd8] sm:$0xff] %vm739, %v504
        %768 = vst.msk [vmem:[%s143 + $0xe0] sm:$0xff] %vm739, %v511
        %769 = vst.msk [vmem:[%s143 + $0xe8] sm:$0xff] %vm739, %v517
        %770 = vst.msk [vmem:[%s143 + $0xf0] sm:$0xff] %vm739, %v524
        %771 = vst.msk [vmem:[%s143 + $0xf8] sm:$0xff] %vm739, %v530
        %772 = vst.msk [vmem:[%s143 + $0x100] sm:$0xff] %vm739, %v537
        %773 = vst.msk [vmem:[%s143 + $0x108] sm:$0xff] %vm739, %v543
        %774 = vst.msk [vmem:[%s143 + $0x110] sm:$0xff] %vm739, %v550
        %775 = vst.msk [vmem:[%s143 + $0x118] sm:$0xff] %vm739, %v556
        %776 = vst.msk [vmem:[%s143 + $0x120] sm:$0xff] %vm739, %v563
        %777 = vst.msk [vmem:[%s143 + $0x128] sm:$0xff] %vm739, %v569
        %778 = vst.msk [vmem:[%s143 + $0x130] sm:$0xff] %vm739, %v576
        %779 = vst.msk [vmem:[%s143 + $0x138] sm:$0xff] %vm739, %v582
        %780 = vst.msk [vmem:[%s143 + $0x140] sm:$0xff] %vm739, %v589
        %781 = vst.msk [vmem:[%s143 + $0x148] sm:$0xff] %vm739, %v595
        %782 = vst.msk [vmem:[%s143 + $0x150] sm:$0xff] %vm739, %v602
        %783 = vst.msk [vmem:[%s143 + $0x158] sm:$0xff] %vm739, %v608
        %784 = vst.msk [vmem:[%s143 + $0x160] sm:$0xff] %vm739, %v615
        %785 = vst.msk [vmem:[%s143 + $0x168] sm:$0xff] %vm739, %v621
        %786 = vst.msk [vmem:[%s143 + $0x170] sm:$0xff] %vm739, %v628
        %787 = vst.msk [vmem:[%s143 + $0x178] sm:$0xff] %vm739, %v634
        %788 = vst.msk [vmem:[%s143 + $0x180] sm:$0xff] %vm739, %v641
        %789 = vst.msk [vmem:[%s143 + $0x188] sm:$0xff] %vm739, %v647
        %790 = vst.msk [vmem:[%s143 + $0x190] sm:$0xff] %vm739, %v654
        %791 = vst.msk [vmem:[%s143 + $0x198] sm:$0xff] %vm739, %v660
        %792 = vst.msk [vmem:[%s143 + $0x1a0] sm:$0xff] %vm739, %v667
        %793 = vst.msk [vmem:[%s143 + $0x1a8] sm:$0xff] %vm739, %v673
        %794 = vst.msk [vmem:[%s143 + $0x1b0] sm:$0xff] %vm739, %v680
        %795 = vst.msk [vmem:[%s143 + $0x1b8] sm:$0xff] %vm739, %v686
        %796 = vst.msk [vmem:[%s143 + $0x1c0] sm:$0xff] %vm739, %v693
        %797 = vst.msk [vmem:[%s143 + $0x1c8] sm:$0xff] %vm739, %v699
        %798 = vst.msk [vmem:[%s143 + $0x1d0] sm:$0xff] %vm739, %v706
        %799 = vst.msk [vmem:[%s143 + $0x1d8] sm:$0xff] %vm739, %v712
        %800 = vst.msk [vmem:[%s143 + $0x1e0] sm:$0xff] %vm739, %v719
        %801 = vst.msk [vmem:[%s143 + $0x1e8] sm:$0xff] %vm739, %v725
        %802 = vst.msk [vmem:[%s143 + $0x1f0] sm:$0xff] %vm739, %v732
        %803 = vst.msk [vmem:[%s143 + $0x1f8] sm:$0xff] %vm739, %v738
      $region32: #{tpu_custom_call.1} parent=23 // pred_fallthru
        _
      %s804 = sadd.s32 %s16, %s17
      %s805 = smul.u32 32, %s804
      %p806 = scmp.lt.s32.totalorder %s805, 63
      %s807 = scalar_select %p806, %s805, 63
      %s808 = smul.addr %s807, 2
      %s809 = smul.addr %s808, 8
      %s810 = scalar_lea.vmem %s1, %s809
      // Predicated region
      $region33: #{tpu_custom_call.1} parent=23 // pred_check
        %p811 = pneg %p72
      $region34: #{tpu_custom_call.1} parent=23 // pred_check_branch
        %813 = sbr.rel (%p811) target = $region36
      $region35: #{tpu_custom_call.1} parent=23 // pred_region
        %s814 = sadd.s32 %s16, %s17
        %s815 = smul.u32 32, %s814
      $region36: #{tpu_custom_call.1} parent=23 // pred_fallthru
        _
    $region24: #{tpu_custom_call.1} parent=5 // pred_fallthru
      _
    %p816 = scmp.le.s32.totalorder 2, %s7
    // Predicated region
    $region37: #{tpu_custom_call.1} parent=5 // pred_check
      %p817 = pneg %p816
    $region38: #{tpu_custom_call.1} parent=5 // pred_check_branch
      %819 = sbr.rel (%p817) target = $region40
    $region39: #{tpu_custom_call.1} parent=5 // pred_region
      %s820 = ssub.s32 %s7, 2
      // Predicated region
      $region41: #{tpu_custom_call.1} parent=39 // pred_check
        %p821 = pneg %p78
      $region42: #{tpu_custom_call.1} parent=39 // pred_check_branch
        %823 = sbr.rel (%p821) target = $region44
      $region43: #{tpu_custom_call.1} parent=39 // pred_region
        %s824 = sadd.s32 %s18, %s19
        %s825 = smul.u32 32, %s824
        %p826 = scmp.lt.s32.totalorder %s825, 63
        %s827 = scalar_select %p826, %s825, 63
        %s828 = smul.addr %s827, 2
        %s829 = smul.addr %s828, 8
        %s830 = scalar_lea.vmem %s1, %s829
      $region44: #{tpu_custom_call.1} parent=39 // pred_fallthru
        _
    $region40: #{tpu_custom_call.1} parent=5 // pred_fallthru
      _
  $region6: #{tpu_custom_call.1} parent=0 // loop_footer
    %s11 = sadd.s32 1, %s7
  $region7: #{tpu_custom_call.1} parent=0 // loop_footer_branch
    %6 = sbr.rel target = $region3
  $region8: #{tpu_custom_call.1} parent=0 // loop_exit
    _

</llo_original>
